<compile_context>
chip_gen: v6e
topology: v6e:2x2x1
jax: 0.10.0
libtpu: 0.0.40
codegen_flags: <defaults>
</compile_context>

<pallas_src>
import functools

import jax
import jax.numpy as jnp
from jax.experimental import pallas as pl
from jax.experimental.pallas import tpu as pltpu


def _outconv_kernel_vpu(x_ref, w_ref, b_ref, o_ref, *, c_in):
    # x_ref: (C_in, T) or (C_in, t_s, 128); w_ref: (C_out, C_in); b_ref: (C_out, 1)
    # o_ref: (C_out, T) or (C_out, t_s, 128)
    x = x_ref[...].astype(jnp.float32)
    w = w_ref[...].astype(jnp.float32)
    b = b_ref[...].astype(jnp.float32)
    col = (w.shape[0],) + (1,) * (x.ndim - 1)   # (C_out, 1[, 1]) broadcast shape
    # Unrolled VPU FMA over the (tiny) channel axis; bias folded into the init
    # so there is no extra epilogue pass over the tile.
    # TODO(synk): try a stride-0 sublane-broadcast load (pl.ds(c, C_out, stride=0))
    # to move the per-channel broadcast onto the load path if VALU ever binds.
    acc = w[:, 0].reshape(col) * x[0:1] + b.reshape(col)
    for c in range(1, c_in):
        acc = acc + w[:, c].reshape(col) * x[c:c + 1]
    o_ref[...] = acc.astype(o_ref.dtype)


def _outconv_kernel_mxu(x_ref, w_ref, b_ref, o_ref):
    # Fallback for large channel counts (2D lane layout):
    # (C_out, C_in) @ (C_in, T) on the MXU with f32 accumulation.
    acc = jnp.dot(w_ref[...], x_ref[...], preferred_element_type=jnp.float32)
    o_ref[...] = (acc + b_ref[...].astype(jnp.float32)).astype(o_ref.dtype)


def out_conv(x_nchw, weight, bias, *, vmem_budget_bytes=10 << 20, target_lanes=1 << 16):
    """1x1 Conv2d forward, matching nn.Conv2d(in_channels, out_channels, 1).

    x_nchw: (N, C_in, H, W); weight: (C_out, C_in, 1, 1); bias: (C_out,)
    returns (N, C_out, H, W)
    """
    N, C_in, H, W = x_nchw.shape
    C_out = weight.shape[0]
    hw = H * W
    itemsize = jnp.dtype(x_nchw.dtype).itemsize

    w_mat = weight.reshape(C_out, C_in)
    b_col = bias.reshape(C_out, 1)

    # Tiny-channel heads stay on the VPU (a (C_out, C_in) matmul would occupy
    # ~C_out/256 of the MXU and adds push/pop latency to a memory-bound op);
    # larger channel counts go to the MXU.
    use_vpu = (C_in <= 32) and (C_out <= 8)
    # The dense (hw/128, 128) layout is what fixes the sublane-sparse vregs of
    # the tiny-channel VPU path; it needs hw % 128 == 0 for the reshape to be free.
    use_4d = use_vpu and (hw % 128 == 0)

    kernel = (functools.partial(_outconv_kernel_vpu, c_in=C_in)
              if use_vpu else _outconv_kernel_mxu)

    cost = pl.CostEstimate(
        flops=2 * N * hw * C_in * C_out,
        transcendentals=0,
        bytes_accessed=(N * hw * (C_in + C_out) + C_out * (C_in + 1)) * itemsize,
    )

    if use_4d:
        # Spatial on sublanes AND lanes: (N, C, S, 128), a free row-major split.
        S = hw // 128
        # Exact VMEM accounting: (in + out) channels, double-buffered, per sublane row.
        bytes_per_srow = 2 * (C_in + C_out) * 128 * itemsize
        t_s = min(target_lanes // 128,
                  max(8, ((vmem_budget_bytes // bytes_per_srow) // 8) * 8))
        t_s = max(8, (t_s // 8) * 8)
        if S <= t_s:
            t_s = S                      # single spatial tile: block == full dim
        num_sp = pl.cdiv(S, t_s)
        # Keep >= 2 grid steps so both v7x TensorCores get work.
        if N * num_sp < 2 and S >= 16:
            t_s = max(8, ((pl.cdiv(S, 2) + 7) // 8) * 8)
            num_sp = pl.cdiv(S, t_s)

        x_in = x_nchw.reshape(N, C_in, S, 128)
        grid = (num_sp, N)               # long (spatial) parallel axis first
        in_specs = [
            pl.BlockSpec((None, C_in, t_s, 128), lambda j, n: (n, 0, j, 0)),
            pl.BlockSpec((C_out, C_in), lambda j, n: (0, 0)),   # resident weights
            pl.BlockSpec((C_out, 1), lambda j, n: (0, 0)),      # resident bias
        ]
        out_specs = pl.BlockSpec((None, C_out, t_s, 128), lambda j, n: (n, 0, j, 0))
        out_shape = jax.ShapeDtypeStruct((N, C_out, S, 128), x_nchw.dtype)
    else:
        # Lane-only spatial layout; last tile may be ragged (partial block:
        # padded reads, masked writes -- safe because the op is pointwise in hw).
        sub_rows = (pl.cdiv(C_in, 8) + pl.cdiv(C_out, 8)) * 8   # sublane padding
        bytes_per_lane = 2 * sub_rows * itemsize
        t_hw = ((vmem_budget_bytes // bytes_per_lane) // 128) * 128
        t_hw = max(128, min(t_hw, target_lanes, pl.cdiv(hw, 128) * 128))
        num_sp = pl.cdiv(hw, t_hw)
        if N * num_sp < 2 and hw > 256:
            t_hw = max(128, pl.cdiv(hw, 2 * 128) * 128)
            num_sp = pl.cdiv(hw, t_hw)

        x_in = x_nchw.reshape(N, C_in, hw)
        grid = (num_sp, N)
        in_specs = [
            pl.BlockSpec((None, C_in, t_hw), lambda j, n: (n, 0, j)),
            pl.BlockSpec((C_out, C_in), lambda j, n: (0, 0)),
            pl.BlockSpec((C_out, 1), lambda j, n: (0, 0)),
        ]
        out_specs = pl.BlockSpec((None, C_out, t_hw), lambda j, n: (n, 0, j))
        out_shape = jax.ShapeDtypeStruct((N, C_out, hw), x_nchw.dtype)

    out = pl.pallas_call(
        kernel,
        out_shape=out_shape,
        grid_spec=pltpu.PrefetchScalarGridSpec(
            num_scalar_prefetch=0,
            grid=grid,
            in_specs=in_specs,
            out_specs=out_specs,
        ),
        compiler_params=pltpu.CompilerParams(
            dimension_semantics=("parallel", "parallel"),
        ),
        cost_estimate=cost,
    )(x_in, w_mat, b_col)

    return out.reshape(N, C_out, H, W)


if __name__ == "__main__":
    key = jax.random.PRNGKey(0)
    kx, kw, kb, kx2 = jax.random.split(key, 4)

    # nn.Conv2d(in_channels=4, out_channels=3, kernel_size=1) parameter shapes.
    N, C_in, C_out, H, W = 2, 4, 3, 16, 16
    x = jax.random.normal(kx, (N, C_in, H, W), dtype=jnp.float32)
    weight = jax.random.normal(kw, (C_out, C_in, 1, 1), dtype=jnp.float32) * 0.1
    bias = jax.random.normal(kb, (C_out,), dtype=jnp.float32) * 0.1

    def ref(xv, wv, bv):
        return jnp.einsum("nchw,oc->nohw", xv, wv.reshape(wv.shape[0], -1)) + bv[
            None, :, None, None
        ]

    # Main path: hw % 128 == 0 -> dense (sublane, lane) layout.
    y = jax.block_until_ready(out_conv(x, weight, bias))
    assert y.shape == (N, C_out, H, W)
    assert jnp.allclose(y, ref(x, weight, bias), atol=1e-5, rtol=1e-5)

    # Ragged path: hw % 128 != 0 -> partial trailing block, no explicit padding.
    H2, W2 = 16, 20  # hw = 320
    x2 = jax.random.normal(kx2, (N, C_in, H2, W2), dtype=jnp.float32)
    y2 = jax.block_until_ready(out_conv(x2, weight, bias, target_lanes=128))
    assert y2.shape == (N, C_out, H2, W2)
    assert jnp.allclose(y2, ref(x2, weight, bias), atol=1e-5, rtol=1e-5)

    print("KERNEL_OK")
</pallas_src>

<mosaic_0001>
module attributes {stable_mosaic.version = 11 : i64} {
  func.func @_outconv_kernel_vpu(%arg0: i32, %arg1: i32, %arg2: memref<1x4x2x128xf32, #tpu.memory_space<vmem>>, %arg3: memref<3x4xf32, #tpu.memory_space<vmem>>, %arg4: memref<3x1xf32, #tpu.memory_space<vmem>>, %arg5: memref<1x3x2x128xf32, #tpu.memory_space<vmem>>) attributes {dimension_semantics = [#tpu.dimension_semantics<parallel>, #tpu.dimension_semantics<parallel>], iteration_bounds = array<i64: 1, 2>, scalar_prefetch = 0 : i64, scratch_operands = 0 : i64, tpu.core_type = #tpu.core_type<tc>, window_params = [{transform_indices = @transform_0, window_bounds = array<i64: 1, 4, 2, 128>}, {pipeline_mode = #tpu.pipeline_mode<synchronous>, transform_indices = @transform_1, window_bounds = array<i64: 3, 4>}, {pipeline_mode = #tpu.pipeline_mode<synchronous>, transform_indices = @transform_2, window_bounds = array<i64: 3, 1>}, {transform_indices = @transform_3, window_bounds = array<i64: 1, 3, 2, 128>}]} {
    %c0 = arith.constant 0 : index
    %c0_0 = arith.constant 0 : index
    %c0_1 = arith.constant 0 : index
    %c0_2 = arith.constant 0 : index
    %0 = vector.load %arg2[%c0, %c0_0, %c0_1, %c0_2] : memref<1x4x2x128xf32, #tpu.memory_space<vmem>>, vector<1x4x2x128xf32>
    %1 = vector.shape_cast %0 : vector<1x4x2x128xf32> to vector<4x2x128xf32>
    %c0_3 = arith.constant 0 : index
    %c0_4 = arith.constant 0 : index
    %2 = vector.load %arg3[%c0_3, %c0_4] : memref<3x4xf32, #tpu.memory_space<vmem>>, vector<3x4xf32>
    %c0_5 = arith.constant 0 : index
    %c0_6 = arith.constant 0 : index
    %3 = vector.load %arg4[%c0_5, %c0_6] : memref<3x1xf32, #tpu.memory_space<vmem>>, vector<3x1xf32>
    %4 = vector.extract_strided_slice %2 {offsets = [0, 0], sizes = [3, 1], strides = [1, 1]} : vector<3x4xf32> to vector<3x1xf32>
    %5 = vector.shape_cast %4 : vector<3x1xf32> to vector<3xf32>
    %6 = vector.shape_cast %5 : vector<3xf32> to vector<3x1x1xf32>
    %7 = vector.extract_strided_slice %1 {offsets = [0, 0, 0], sizes = [1, 2, 128], strides = [1, 1, 1]} : vector<4x2x128xf32> to vector<1x2x128xf32>
    %8 = vector.broadcast %6 : vector<3x1x1xf32> to vector<3x2x128xf32>
    %9 = vector.broadcast %7 : vector<1x2x128xf32> to vector<3x2x128xf32>
    %10 = arith.mulf %8, %9 : vector<3x2x128xf32>
    %11 = vector.shape_cast %3 : vector<3x1xf32> to vector<3x1x1xf32>
    %12 = vector.broadcast %11 : vector<3x1x1xf32> to vector<3x2x128xf32>
    %13 = arith.addf %10, %12 : vector<3x2x128xf32>
    %14 = vector.extract_strided_slice %2 {offsets = [0, 1], sizes = [3, 1], strides = [1, 1]} : vector<3x4xf32> to vector<3x1xf32>
    %15 = vector.shape_cast %14 : vector<3x1xf32> to vector<3xf32>
    %16 = vector.shape_cast %15 : vector<3xf32> to vector<3x1x1xf32>
    %17 = vector.extract_strided_slice %1 {offsets = [1, 0, 0], sizes = [1, 2, 128], strides = [1, 1, 1]} : vector<4x2x128xf32> to vector<1x2x128xf32>
    %18 = vector.broadcast %16 : vector<3x1x1xf32> to vector<3x2x128xf32>
    %19 = vector.broadcast %17 : vector<1x2x128xf32> to vector<3x2x128xf32>
    %20 = arith.mulf %18, %19 : vector<3x2x128xf32>
    %21 = arith.addf %13, %20 : vector<3x2x128xf32>
    %22 = vector.extract_strided_slice %2 {offsets = [0, 2], sizes = [3, 1], strides = [1, 1]} : vector<3x4xf32> to vector<3x1xf32>
    %23 = vector.shape_cast %22 : vector<3x1xf32> to vector<3xf32>
    %24 = vector.shape_cast %23 : vector<3xf32> to vector<3x1x1xf32>
    %25 = vector.extract_strided_slice %1 {offsets = [2, 0, 0], sizes = [1, 2, 128], strides = [1, 1, 1]} : vector<4x2x128xf32> to vector<1x2x128xf32>
    %26 = vector.broadcast %24 : vector<3x1x1xf32> to vector<3x2x128xf32>
    %27 = vector.broadcast %25 : vector<1x2x128xf32> to vector<3x2x128xf32>
    %28 = arith.mulf %26, %27 : vector<3x2x128xf32>
    %29 = arith.addf %21, %28 : vector<3x2x128xf32>
    %30 = vector.extract_strided_slice %2 {offsets = [0, 3], sizes = [3, 1], strides = [1, 1]} : vector<3x4xf32> to vector<3x1xf32>
    %31 = vector.shape_cast %30 : vector<3x1xf32> to vector<3xf32>
    %32 = vector.shape_cast %31 : vector<3xf32> to vector<3x1x1xf32>
    %33 = vector.extract_strided_slice %1 {offsets = [3, 0, 0], sizes = [1, 2, 128], strides = [1, 1, 1]} : vector<4x2x128xf32> to vector<1x2x128xf32>
    %34 = vector.broadcast %32 : vector<3x1x1xf32> to vector<3x2x128xf32>
    %35 = vector.broadcast %33 : vector<1x2x128xf32> to vector<3x2x128xf32>
    %36 = arith.mulf %34, %35 : vector<3x2x128xf32>
    %37 = arith.addf %29, %36 : vector<3x2x128xf32>
    %c0_7 = arith.constant 0 : index
    %c0_8 = arith.constant 0 : index
    %c0_9 = arith.constant 0 : index
    %c0_10 = arith.constant 0 : index
    %38 = vector.load %arg5[%c0_7, %c0_8, %c0_9, %c0_10] : memref<1x3x2x128xf32, #tpu.memory_space<vmem>>, vector<1x3x2x128xf32>
    %39 = vector.shape_cast %38 : vector<1x3x2x128xf32> to vector<3x2x128xf32>
    %40 = vector.shape_cast %37 : vector<3x2x128xf32> to vector<1x3x2x128xf32>
    tpu.vector_store %arg5[%c0_7, %c0_8, %c0_9, %c0_10], %40 {strides = array<i32>} : memref<1x3x2x128xf32, #tpu.memory_space<vmem>>, vector<1x3x2x128xf32>,
    return
  }
  func.func @transform_0(%arg0: i32, %arg1: i32) -> (i32, i32, i32, i32) {
    %c0_i32 = arith.constant 0 : i32
    %c0_i32_0 = arith.constant 0 : i32
    %c0_i32_1 = arith.constant 0 : i32
    return %arg1, %c0_i32, %arg0, %c0_i32_0 : i32, i32, i32, i32
  }
  func.func @transform_1(%arg0: i32, %arg1: i32) -> (i32, i32) {
    %c0_i32 = arith.constant 0 : i32
    %c0_i32_0 = arith.constant 0 : i32
    %c0_i32_1 = arith.constant 0 : i32
    return %c0_i32, %c0_i32_0 : i32, i32
  }
  func.func @transform_2(%arg0: i32, %arg1: i32) -> (i32, i32) {
    %c0_i32 = arith.constant 0 : i32
    %c0_i32_0 = arith.constant 0 : i32
    %c0_i32_1 = arith.constant 0 : i32
    return %c0_i32, %c0_i32_0 : i32, i32
  }
  func.func @transform_3(%arg0: i32, %arg1: i32) -> (i32, i32, i32, i32) {
    %c0_i32 = arith.constant 0 : i32
    %c0_i32_0 = arith.constant 0 : i32
    %c0_i32_1 = arith.constant 0 : i32
    return %arg1, %c0_i32, %arg0, %c0_i32_0 : i32, i32, i32, i32
  }
}

</mosaic_0001>

<llo_original>
// kernel: tpu_custom_call.1
$region0: #{tpu_custom_call.1}
  #allocation0 [shape = 'u32[]', space=smem, size = 0x4, offset = 0x4, fixed_abs, tag = 'smem constant byte address 0x4 - core index']
  #allocation1 [shape = 'u32[144,128]{1,0:T(1,128)}', space=vmem, size = 0x12000, scoped, tag = 'internal scratch']
  %s0 = inlined_call_operand.hbm [shape: f32[2,4,2,128], index: 0, kind: input, shape index: {}]
  %s1 = inlined_call_operand.vmem [shape: f32[3,4], index: 1, kind: input, shape index: {}]
  %s2 = inlined_call_operand.vmem [shape: f32[3,1], index: 2, kind: input, shape index: {}]
  %s3 = inlined_call_operand.hbm [shape: f32[2,3,2,128], index: 3, kind: output, shape index: {}]
  %s4 = sld [smem:[#allocation0]]
  $region49: #{tpu_custom_call.1} parent=0
    _
  %s6 = ssub.s32 1, %s4
  %s7 = scalar_select 0, %s6, %s4
  $region1: #{tpu_custom_call.1} parent=0
    #allocation2 [shape = 'u8[8192]{0}', space=vmem, size = 0x2000, scoped, tag = 'input window, operand 0']
    #allocation3 [shape = 's32[2]{0}', space=sflag, size = 0x8, scoped, tag = 'scoped memory for tpu_custom_call.1']
    #allocation4 [shape = 's32[2]{0}', space=sflag, size = 0x8, scoped, tag = 'scoped memory for tpu_custom_call.1']
    #allocation5 [shape = 'u8[6144]{0}', space=vmem, size = 0x1800, scoped, tag = 'output window, operand 0']
    %8 = vsyncpa [#allocation3], 0
    %s9 = scalar_lea.sflag [#allocation3], 1
    %10 = vsyncpa %s9, 0
    %11 = vsyncpa [#allocation4], 0
    %s12 = scalar_lea.sflag [#allocation4], 1
    %13 = vsyncpa %s12, 0
    loop: start=0, step=1, limit=4
    $region2: #{tpu_custom_call.1} parent=1 // loop_pre_header
      _
    $region3: #{tpu_custom_call.1} parent=1 // loop_header
      %s15 = sphi 0, %s19
      %p16 = scmp.ge.s32.totalorder %s15, 4
      %s22 = sphi 0, %s34
      %s23 = sphi 0, %s30
      %s24 = sphi 0, %s22
      %s25 = sphi 0, %s23
      %s26 = sphi 0, %s24
      %s27 = sphi 0, %s25
      %s39 = sphi 0, %s41
      %s42 = sphi 0, %s39
      %s43 = sphi 0, %s42
      %s59 = sphi 0, %s43
      %s63 = sphi 0, %s63
      %s65 = sphi 0, %s63
      %s66 = sphi 0, %s65
      %s80 = sphi 0, %s66
      %s84 = sphi 0, %s84
      %s86 = sphi 0, %s84
      %s87 = sphi 0, %s86
      %s101 = sphi 0, %s87
      %s109 = sphi 0, %s111
      %s112 = sphi 0, %s109
      %s113 = sphi 0, %s112
      %s129 = sphi 0, %s113
    $region4: #{tpu_custom_call.1} parent=1 // loop_header_branch
      %18 = sbr.rel (%p16) target = $region8
    $region5: #{tpu_custom_call.1} parent=1 // loop_body
      %s20 = ssub.s32 %s15, 1
      %s21 = ssub.s32 %s15, 2
      %s28 = sadd.s32 1, %s23
      %p29 = scmp.ge.s32.totalorder %s28, 2
      %s30 = scalar_select %p29, 0, %s28
      %s31 = sadd.s32 1, %s22
      %s32 = scalar_select %p29, %s31, %s22
      %p33 = scmp.ge.s32.totalorder %s32, 1
      %s34 = scalar_select %p33, 0, %s32
      %s35 = ssub.s32 %s23, %s30
      %s36 = ssub.s32 %s22, %s34
      %s37 = sor.u32 %s35, %s36
      %p38 = scmp.eq.s32.totalorder %s37, 0
      %s40 = sadd.s32 %s39, 1
      %s41 = scalar_select %p38, %s39, %s40
      %p44 = pneg %p38
      %p45 = scmp.eq.s32.totalorder %s15, 1
      %p46 = por %p44, %p45
      %p47 = scmp.ne.s32.totalorder %s39, %s42
      %p48 = scmp.eq.s32.totalorder %s15, 0
      %p49 = por %p47, %p48
      %p50 = scmp.ne.s32.totalorder %s39, %s42
      %p51 = scmp.eq.s32.totalorder %s20, 1
      %p52 = por %p50, %p51
      %p53 = scmp.ne.s32.totalorder %s42, %s43
      %p54 = scmp.eq.s32.totalorder %s20, 0
      %p55 = por %p53, %p54
      %p56 = scmp.ne.s32.totalorder %s42, %s43
      %p57 = scmp.eq.s32.totalorder %s21, 1
      %p58 = por %p56, %p57
      %p60 = scmp.ne.s32.totalorder %s43, %s59
      %p61 = scmp.eq.s32.totalorder %s21, 0
      %p62 = por %p60, %p61
      %s64 = sadd.s32 %s63, 1
      %p67 = scmp.eq.s32.totalorder %s15, 1
      %p68 = scmp.ne.s32.totalorder %s63, %s65
      %p69 = scmp.eq.s32.totalorder %s15, 0
      %p70 = por %p68, %p69
      %p71 = scmp.ne.s32.totalorder %s63, %s65
      %p72 = scmp.eq.s32.totalorder %s20, 1
      %p73 = por %p71, %p72
      %p74 = scmp.ne.s32.totalorder %s65, %s66
      %p75 = scmp.eq.s32.totalorder %s20, 0
      %p76 = por %p74, %p75
      %p77 = scmp.ne.s32.totalorder %s65, %s66
      %p78 = scmp.eq.s32.totalorder %s21, 1
      %p79 = por %p77, %p78
      %p81 = scmp.ne.s32.totalorder %s66, %s80
      %p82 = scmp.eq.s32.totalorder %s21, 0
      %p83 = por %p81, %p82
      %s85 = sadd.s32 %s84, 1
      %p88 = scmp.eq.s32.totalorder %s15, 1
      %p89 = scmp.ne.s32.totalorder %s84, %s86
      %p90 = scmp.eq.s32.totalorder %s15, 0
      %p91 = por %p89, %p90
      %p92 = scmp.ne.s32.totalorder %s84, %s86
      %p93 = scmp.eq.s32.totalorder %s20, 1
      %p94 = por %p92, %p93
      %p95 = scmp.ne.s32.totalorder %s86, %s87
      %p96 = scmp.eq.s32.totalorder %s20, 0
      %p97 = por %p95, %p96
      %p98 = scmp.ne.s32.totalorder %s86, %s87
      %p99 = scmp.eq.s32.totalorder %s21, 1
      %p100 = por %p98, %p99
      %p102 = scmp.ne.s32.totalorder %s87, %s101
      %p103 = scmp.eq.s32.totalorder %s21, 0
      %p104 = por %p102, %p103
      %s105 = ssub.s32 %s23, %s30
      %s106 = ssub.s32 %s22, %s34
      %s107 = sor.u32 %s105, %s106
      %p108 = scmp.eq.s32.totalorder %s107, 0
      %s110 = sadd.s32 %s109, 1
      %s111 = scalar_select %p108, %s109, %s110
      %p114 = pneg %p108
      %p115 = scmp.eq.s32.totalorder %s15, 1
      %p116 = por %p114, %p115
      %p117 = scmp.ne.s32.totalorder %s109, %s112
      %p118 = scmp.eq.s32.totalorder %s15, 0
      %p119 = por %p117, %p118
      %p120 = scmp.ne.s32.totalorder %s109, %s112
      %p121 = scmp.eq.s32.totalorder %s20, 1
      %p122 = por %p120, %p121
      %p123 = scmp.ne.s32.totalorder %s112, %s113
      %p124 = scmp.eq.s32.totalorder %s20, 0
      %p125 = por %p123, %p124
      %p126 = scmp.ne.s32.totalorder %s112, %s113
      %p127 = scmp.eq.s32.totalorder %s21, 1
      %p128 = por %p126, %p127
      %p130 = scmp.ne.s32.totalorder %s113, %s129
      %p131 = scmp.eq.s32.totalorder %s21, 0
      %p132 = por %p130, %p131
      %p133 = scmp.le.s32.totalorder 1, %s15
      %p134 = scmp.lt.s32.totalorder %s15, 3
      %p135 = pnand %p133, %p134
      %p136 = pneg %p135
      // Predicated region
      $region9: #{tpu_custom_call.1} parent=5 // pred_check
        _
      $region10: #{tpu_custom_call.1} parent=5 // pred_check_branch
        %138 = sbr.rel (%p135) target = $region12
      $region11: #{tpu_custom_call.1} parent=5 // pred_region
        %s139 = ssub.s32 %s15, 1
        // Predicated region
        $region13: #{tpu_custom_call.1} parent=11 // pred_check
          %p140 = pneg %p76
        $region14: #{tpu_custom_call.1} parent=11 // pred_check_branch
          %142 = sbr.rel (%p140) target = $region16
        $region15: #{tpu_custom_call.1} parent=11 // pred_region
          _
        $region16: #{tpu_custom_call.1} parent=11 // pred_fallthru
          _
        // Predicated region
        $region17: #{tpu_custom_call.1} parent=11 // pred_check
          %p143 = pneg %p97
        $region18: #{tpu_custom_call.1} parent=11 // pred_check_branch
          %145 = sbr.rel (%p143) target = $region20
        $region19: #{tpu_custom_call.1} parent=11 // pred_region
          _
        $region20: #{tpu_custom_call.1} parent=11 // pred_fallthru
          _
      $region12: #{tpu_custom_call.1} parent=5 // pred_fallthru
        _
      %p146 = scmp.lt.s32.totalorder %s15, 2
      // Predicated region
      $region21: #{tpu_custom_call.1} parent=5 // pred_check
        %p147 = pneg %p146
      $region22: #{tpu_custom_call.1} parent=5 // pred_check_branch
        %149 = sbr.rel (%p147) target = $region24
      $region23: #{tpu_custom_call.1} parent=5 // pred_region
        // Predicated region
        $region25: #{tpu_custom_call.1} parent=23 // pred_check
          %p150 = pneg %p49
        $region26: #{tpu_custom_call.1} parent=23 // pred_check_branch
          %152 = sbr.rel (%p150) target = $region28
        $region27: #{tpu_custom_call.1} parent=23 // pred_region
          %s153 = sand.u32 %s39, 1
          %s154 = scalar_lea.sflag [#allocation3], %s153
          %s155 = sand.u32 %s39, 1
          %s156 = smul.addr %s155, 8
          %s157 = scalar_lea.vmem [#allocation2], %s156
          %s159 = ssub.s32 128, 128
          %160 = vsyncadd %s154, %s159
          %s161 = smul.addr %s23, 4
          %s162 = sadd.s32 %s22, %s161
          %s163 = smul.addr %s162, 32
          %s164 = scalar_lea.hbm %s0, %s163
          %s165 = sshll.u32 %s157, 4
          %s166 = int_to_ptr.vmem [resolvable:$true] %s165
          %171 = dma.hbm_to_vmem [thread:$0]  %s164, 128, %s166, %s154, 32, 32, 2
        $region28: #{tpu_custom_call.1} parent=23 // pred_fallthru
          _
      $region24: #{tpu_custom_call.1} parent=5 // pred_fallthru
        _
      %p172 = scmp.le.s32.totalorder 1, %s15
      %p173 = scmp.lt.s32.totalorder %s15, 3
      %p174 = pnand %p172, %p173
      %p175 = pneg %p174
      // Predicated region
      $region29: #{tpu_custom_call.1} parent=5 // pred_check
        _
      $region30: #{tpu_custom_call.1} parent=5 // pred_check_branch
        %177 = sbr.rel (%p174) target = $region32
      $region31: #{tpu_custom_call.1} parent=5 // pred_region
        %s178 = ssub.s32 %s15, 1
        %s179 = sand.u32 %s42, 1
        %s180 = scalar_lea.sflag [#allocation3], %s179
        %s181 = sand.u32 %s42, 1
        %s182 = smul.addr %s181, 8
        %s183 = scalar_lea.vmem [#allocation2], %s182
        // Predicated region
        $region33: #{tpu_custom_call.1} parent=31 // pred_check
          %p184 = pneg %p55
        $region34: #{tpu_custom_call.1} parent=31 // pred_check_branch
          %186 = sbr.rel (%p184) target = $region36
        $region35: #{tpu_custom_call.1} parent=31 // pred_region
          %187 = dma.done %s180, 128
        $region36: #{tpu_custom_call.1} parent=31 // pred_fallthru
          _
        %s188 = sand.u32 %s42, 1
        %s189 = scalar_lea.sflag [#allocation3], %s188
        %s190 = sand.u32 %s42, 1
        %s191 = smul.addr %s190, 8
        %s192 = scalar_lea.vmem [#allocation2], %s191
        %p193 = pneg %p55
        %p194 = pneg %p52
        %p195 = pneg %p76
        %p196 = pneg %p73
        %p197 = pneg %p97
        %p198 = pneg %p94
        %p199 = pneg %p125
        %p200 = pneg %p122
        %s201 = sand.u32 %s112, 1
        %s202 = scalar_lea.sflag [#allocation4], %s201
        %s203 = sand.u32 %s112, 1
        %s204 = smul.addr %s203, 6
        %s205 = scalar_lea.vmem [#allocation5], %s204
        %v206 = vld [vmem:[%s183] sm:$0x3]
        %v207 = vld [vmem:[%s183 + $0x2] sm:$0x3]
        %v208 = vld [vmem:[%s183 + $0x4] sm:$0x3]
        %v209 = vld [vmem:[%s183 + $0x6] sm:$0x3]
        %v210 = vld [vmem:[%s1] sm:$0x7]
        %v211 = vld [vmem:[%s2] sm:$0x7]
        %v214 = vunpack.c.l.s4 1966171168
        %v215 = vunpack.c.0.s8 %v214
        %v216 = vlaneseq
        %v217 = vshrl.u32 %v216, 7
        %v218 = vsub.s32 %v215, %v217
        %v219 = vrot.slane %v210, %v218
        %v220 = vcombine.high %v219, %v219
        %v222 = vunpack.c.l.s4 1966171168
        %v223 = vunpack.c.0.s8 %v222
        %v224 = vlaneseq
        %v225 = vshrl.u32 %v224, 7
        %v226 = vsub.s32 %v223, %v225
        %v227 = vrot.slane %v219, %v226
        %v229 = vunpack.c.l.s4 1966171168
        %v230 = vunpack.c.0.s8 %v229
        %v231 = vlaneseq
        %v232 = vshrl.u32 %v231, 7
        %v233 = vsub.s32 %v230, %v232
        %v234 = vrot.slane %v220, %v233
        %v235 = vcombine.high %v227, %v227
        %v236 = vlaneseq
        %v237 = vshrl.u32 %v236, 7
        %v238 = vsub.s32 0, %v237
        %v239 = vrot.slane %v227, %v238
        %v240 = vlaneseq
        %v241 = vshrl.u32 %v240, 7
        %v242 = vsub.s32 0, %v241
        %v243 = vrot.slane %v234, %v242
        %v244 = vlaneseq
        %v245 = vshrl.u32 %v244, 7
        %v246 = vsub.s32 0, %v245
        %v247 = vrot.slane %v235, %v246
        %248 = vset.pattern.permute.xlu0 0
        %249 = vperm.xlu0 %248, %v239
        %v250 = vpop.permute.xlu0 %249
        %252 = vset.pattern.permute.xlu0 0
        %253 = vperm.xlu0 %252, %v243
        %v254 = vpop.permute.xlu0 %253
        %256 = vset.pattern.permute.xlu0 0
        %257 = vperm.xlu0 %256, %v247
        %v258 = vpop.permute.xlu0 %257
        %v260 = vmul.f32 %v250, %v206
        %v261 = vmul.f32 %v254, %v206
        %v262 = vmul.f32 %v258, %v206
        %v265 = vunpack.c.l.s4 1966171168
        %v266 = vunpack.c.0.s8 %v265
        %v267 = vlaneseq
        %v268 = vshrl.u32 %v267, 7
        %v269 = vsub.s32 %v266, %v268
        %v270 = vrot.slane %v211, %v269
        %v271 = vcombine.high %v270, %v270
        %v273 = vunpack.c.l.s4 1966171168
        %v274 = vunpack.c.0.s8 %v273
        %v275 = vlaneseq
        %v276 = vshrl.u32 %v275, 7
        %v277 = vsub.s32 %v274, %v276
        %v278 = vrot.slane %v270, %v277
        %v280 = vunpack.c.l.s4 1966171168
        %v281 = vunpack.c.0.s8 %v280
        %v282 = vlaneseq
        %v283 = vshrl.u32 %v282, 7
        %v284 = vsub.s32 %v281, %v283
        %v285 = vrot.slane %v271, %v284
        %v286 = vcombine.high %v278, %v278
        %v287 = vlaneseq
        %v288 = vshrl.u32 %v287, 7
        %v289 = vsub.s32 0, %v288
        %v290 = vrot.slane %v278, %v289
        %v291 = vlaneseq
        %v292 = vshrl.u32 %v291, 7
        %v293 = vsub.s32 0, %v292
        %v294 = vrot.slane %v285, %v293
        %v295 = vlaneseq
        %v296 = vshrl.u32 %v295, 7
        %v297 = vsub.s32 0, %v296
        %v298 = vrot.slane %v286, %v297
        %299 = vset.pattern.permute.xlu0 0
        %300 = vperm.xlu0 %299, %v290
        %v301 = vpop.permute.xlu0 %300
        %303 = vset.pattern.permute.xlu0 0
        %304 = vperm.xlu0 %303, %v294
        %v305 = vpop.permute.xlu0 %304
        %307 = vset.pattern.permute.xlu0 0
        %308 = vperm.xlu0 %307, %v298
        %v309 = vpop.permute.xlu0 %308
        %v311 = vadd.f32 %v260, %v301
        %v312 = vadd.f32 %v261, %v305
        %v313 = vadd.f32 %v262, %v309
        %314 = vset.pattern.permute.xlu0 1
        %315 = vperm.xlu0 %314, %v239
        %v316 = vpop.permute.xlu0 %315
        %318 = vset.pattern.permute.xlu0 1
        %319 = vperm.xlu0 %318, %v243
        %v320 = vpop.permute.xlu0 %319
        %322 = vset.pattern.permute.xlu0 1
        %323 = vperm.xlu0 %322, %v247
        %v324 = vpop.permute.xlu0 %323
        %v326 = vmul.f32 %v316, %v207
        %v327 = vmul.f32 %v320, %v207
        %v328 = vmul.f32 %v324, %v207
        %v329 = vadd.f32 %v311, %v326
        %v330 = vadd.f32 %v312, %v327
        %v331 = vadd.f32 %v313, %v328
        %332 = vset.pattern.permute.xlu0 2
        %333 = vperm.xlu0 %332, %v239
        %v334 = vpop.permute.xlu0 %333
        %336 = vset.pattern.permute.xlu0 2
        %337 = vperm.xlu0 %336, %v243
        %v338 = vpop.permute.xlu0 %337
        %340 = vset.pattern.permute.xlu0 2
        %341 = vperm.xlu0 %340, %v247
        %v342 = vpop.permute.xlu0 %341
        %v344 = vmul.f32 %v334, %v208
        %v345 = vmul.f32 %v338, %v208
        %v346 = vmul.f32 %v342, %v208
        %v347 = vadd.f32 %v329, %v344
        %v348 = vadd.f32 %v330, %v345
        %v349 = vadd.f32 %v331, %v346
        %350 = vset.pattern.permute.xlu0 3
        %351 = vperm.xlu0 %350, %v239
        %v352 = vpop.permute.xlu0 %351
        %354 = vset.pattern.permute.xlu0 3
        %355 = vperm.xlu0 %354, %v243
        %v356 = vpop.permute.xlu0 %355
        %358 = vset.pattern.permute.xlu0 3
        %359 = vperm.xlu0 %358, %v247
        %v360 = vpop.permute.xlu0 %359
        %v362 = vmul.f32 %v352, %v209
        %v363 = vmul.f32 %v356, %v209
        %v364 = vmul.f32 %v360, %v209
        %v365 = vadd.f32 %v347, %v362
        %v366 = vadd.f32 %v348, %v363
        %v367 = vadd.f32 %v349, %v364
        %368 = vst [vmem:[%s205] sm:$0x3] %v365
        %369 = vst [vmem:[%s205 + $0x2] sm:$0x3] %v366
        %370 = vst [vmem:[%s205 + $0x4] sm:$0x3] %v367
        %s371 = sand.u32 %s112, 1
        %s372 = scalar_lea.sflag [#allocation4], %s371
        %s373 = sand.u32 %s112, 1
        %s374 = smul.addr %s373, 6
        %s375 = scalar_lea.vmem [#allocation5], %s374
        // Predicated region
        $region37: #{tpu_custom_call.1} parent=31 // pred_check
          %p376 = pneg %p122
        $region38: #{tpu_custom_call.1} parent=31 // pred_check_branch
          %378 = sbr.rel (%p376) target = $region40
        $region39: #{tpu_custom_call.1} parent=31 // pred_region
          %s380 = ssub.s32 96, 96
          %381 = vsyncadd %s372, %s380
          %s382 = smul.addr %s25, 3
          %s383 = sadd.s32 %s24, %s382
          %s384 = smul.addr %s383, 32
          %s385 = scalar_lea.hbm %s3, %s384
          %s386 = sshll.u32 %s375, 4
          %s387 = int_to_ptr.vmem [resolvable:$true] %s386
          %392 = dma.vmem_to_hbm [thread:$0]  %s387, 96, %s385, %s372, 32, 32, 2
        $region40: #{tpu_custom_call.1} parent=31 // pred_fallthru
          _
      $region32: #{tpu_custom_call.1} parent=5 // pred_fallthru
        _
      %p393 = scmp.le.s32.totalorder 2, %s15
      // Predicated region
      $region41: #{tpu_custom_call.1} parent=5 // pred_check
        %p394 = pneg %p393
      $region42: #{tpu_custom_call.1} parent=5 // pred_check_branch
        %396 = sbr.rel (%p394) target = $region44
      $region43: #{tpu_custom_call.1} parent=5 // pred_region
        %s397 = ssub.s32 %s15, 2
        // Predicated region
        $region45: #{tpu_custom_call.1} parent=43 // pred_check
          %p398 = pneg %p128
        $region46: #{tpu_custom_call.1} parent=43 // pred_check_branch
          %400 = sbr.rel (%p398) target = $region48
        $region47: #{tpu_custom_call.1} parent=43 // pred_region
          %s401 = sand.u32 %s113, 1
          %s402 = scalar_lea.sflag [#allocation4], %s401
          %s403 = sand.u32 %s113, 1
          %s404 = smul.addr %s403, 6
          %s405 = scalar_lea.vmem [#allocation5], %s404
          %406 = dma.done %s402, 96
        $region48: #{tpu_custom_call.1} parent=43 // pred_fallthru
          _
      $region44: #{tpu_custom_call.1} parent=5 // pred_fallthru
        _
    $region6: #{tpu_custom_call.1} parent=1 // loop_footer
      %s19 = sadd.s32 1, %s15
    $region7: #{tpu_custom_call.1} parent=1 // loop_footer_branch
      %14 = sbr.rel target = $region3
    $region8: #{tpu_custom_call.1} parent=1 // loop_exit
      _
    %407 = vsyncpa [#allocation3], 1
    %s408 = scalar_lea.sflag [#allocation3], 1
    %409 = vsyncpa %s408, 1
    %410 = vsyncpa [#allocation4], 1
    %s411 = scalar_lea.sflag [#allocation4], 1
    %412 = vsyncpa %s411, 1

</llo_original>
